<compile_context>
chip_gen: v7x
topology: tpu7x:2x2x1
jax: 0.10.0
libtpu: 0.0.40
codegen_flags: <defaults>
</compile_context>

<pallas_src>
import jax
import jax.numpy as jnp
from jax import lax
from jax.experimental import pallas as pl
from jax.experimental.pallas import tpu as pltpu

LANE = 128
_MAX_BATCH_TILE = 32768   # keeps double-buffered x (512 B/row padded) <= 32 MiB
_DEFAULT_CHUNK = 2048


def _make_mlp_kernel(chunks):
    """chunks: static tuple of (row_offset, row_count) covering the tb-row block."""

    def kernel(x_ref, w1_ref, b1_ref, w2_ref, b2_ref, o_ref):
        # x_ref:  (tb, 10)  natural batch-major layout (streamed per grid step)
        # w1_ref: (20, 10)  == fc1.weight          (VMEM resident)
        # b1_ref: (20, 1)   == fc1.bias[:, None]   (VMEM resident)
        # w2_ref: (1, 20)   == fc2.weight          (VMEM resident)
        # b2_ref: (1, 1)    == fc2.bias            (SMEM scalar)
        # o_ref:  (1, tb)   lane-dense output slab
        w1 = w1_ref[...]
        b1 = b1_ref[...]
        w2 = w2_ref[...]
        b2 = b2_ref[0, 0]
        for off, sz in chunks:          # static Python unroll; all slices static
            xc = x_ref[pl.ds(off, sz), :]                       # (sz, 10)
            # fc1 on the MXU, contracting the feature axis of both operands:
            # (20, 10) x (sz, 10) -> (20, sz); batch ends up on lanes (dense).
            h = lax.dot_general(
                w1, xc, (((1,), (1,)), ((), ())),
                preferred_element_type=jnp.float32)
            # bias (lane broadcast of (20, 1)) + ReLU on the VPU, lane-dense.
            h = jnp.maximum(h + b1, 0.0)                        # (20, sz)
            # fc2 on the MXU: (1, 20) @ (20, sz) -> (1, sz), lane-dense.
            y = jnp.dot(w2, h, preferred_element_type=jnp.float32) + b2
            o_ref[:, pl.ds(off, sz)] = y.astype(o_ref.dtype)

    return kernel


def mlp_forward(x, w1, b1, w2, b2, *, batch_tile=_MAX_BATCH_TILE,
                chunk=_DEFAULT_CHUNK):
    """x: (B, 10) f32, w1: (20, 10), b1: (20, 1), w2: (1, 20), b2: (1, 1) -> (B,) f32."""
    B, F = x.shape
    assert F == 10, x.shape

    # VMEM budget: (tb, 10) f32 block pads to 128 lanes -> 512 B/row/buffer.
    batch_tile = min(batch_tile, _MAX_BATCH_TILE)
    chunk = min(chunk, batch_tile)
    if B <= batch_tile:
        tb = B                      # single block == full array (always legal)
    else:
        tb = batch_tile             # multiple of 128; last block ragged/clamped
    grid = pl.cdiv(B, tb)

    # Static in-kernel chunk schedule (last chunk ragged only when tb == B).
    chunks = tuple((off, min(chunk, tb - off)) for off in range(0, tb, chunk))

    # v7x has two TensorCores per chip: shard the batch grid axis across them.
    kind = jax.devices()[0].device_kind.lower()
    core_parallel = getattr(pltpu, "CORE_PARALLEL", "parallel")
    semantics = (core_parallel,) if "7" in kind else ("parallel",)

    out = pl.pallas_call(
        _make_mlp_kernel(chunks),
        out_shape=jax.ShapeDtypeStruct((1, B), jnp.float32),
        grid=(grid,),
        in_specs=[
            # x streams over the batch grid axis (double-buffered by Pallas).
            pl.BlockSpec((tb, 10), lambda i: (i, 0)),
            # Params: constant block index -> VMEM-resident across all steps.
            pl.BlockSpec((20, 10), lambda i: (0, 0)),
            pl.BlockSpec((20, 1), lambda i: (0, 0)),
            pl.BlockSpec((1, 20), lambda i: (0, 0)),
            # b2 as an SMEM scalar.
            pl.BlockSpec(memory_space=pltpu.MemorySpace.SMEM),
        ],
        out_specs=pl.BlockSpec((1, tb), lambda i: (0, i)),
        compiler_params=pltpu.CompilerParams(
            dimension_semantics=semantics,
            vmem_limit_bytes=48 << 20,   # fits v7x's 64 MiB physical VMEM
        ),
        cost_estimate=pl.CostEstimate(
            flops=2 * B * (10 * 20 + 20 * 1),
            transcendentals=0,
            bytes_accessed=44 * B + 4 * (20 * 10 + 20 + 20 + 1),
        ),
    )(x, w1, b1, w2, b2)

    # .view(-1) equivalent: free (1, B) -> (B,) reshape, no padding to slice.
    return jnp.reshape(out, (B,))


def init_params(key):
    """torch.nn.Linear-style init (uniform +/- 1/sqrt(fan_in)) in kernel layouts:
      w1: (20, 10) == fc1.weight      b1: (20, 1) == fc1.bias[:, None]
      w2: (1, 20)  == fc2.weight      b2: (1, 1)  == fc2.bias[None, :]
    """
    k1, k2, k3, k4 = jax.random.split(key, 4)
    bound1 = 1.0 / jnp.sqrt(10.0)
    bound2 = 1.0 / jnp.sqrt(20.0)
    w1 = jax.random.uniform(k1, (20, 10), jnp.float32, -bound1, bound1)
    b1 = jax.random.uniform(k2, (20, 1), jnp.float32, -bound1, bound1)
    w2 = jax.random.uniform(k3, (1, 20), jnp.float32, -bound2, bound2)
    b2 = jax.random.uniform(k4, (1, 1), jnp.float32, -bound2, bound2)
    return w1, b1, w2, b2


if __name__ == "__main__":
    key = jax.random.PRNGKey(0)
    k_x, k_p = jax.random.split(key)
    w1, b1, w2, b2 = init_params(k_p)

    for B in (8, 13):   # 13 exercises a non-multiple-of-8 full-array block
        kx = jax.random.fold_in(k_x, B)
        x = jax.random.normal(kx, (B, 10), jnp.float32)

        y = mlp_forward(x, w1, b1, w2, b2)
        jax.block_until_ready(y)

        # Reference in plain JAX (same math as Net.forward).
        h_ref = jnp.maximum(x @ w1.T + b1.reshape(1, -1), 0.0)
        y_ref = (h_ref @ w2.T + b2).reshape(-1)
        assert y.shape == (B,), y.shape
        assert bool(jnp.allclose(y, y_ref, atol=1e-4, rtol=1e-4)), (y, y_ref)

    print("KERNEL_OK")
</pallas_src>

<mosaic_0001>
module attributes {stable_mosaic.version = 11 : i64} {
  func.func @kernel(%arg0: i32, %arg1: memref<8x10xf32, #tpu.memory_space<vmem>>, %arg2: memref<20x10xf32, #tpu.memory_space<vmem>>, %arg3: memref<20x1xf32, #tpu.memory_space<vmem>>, %arg4: memref<1x20xf32, #tpu.memory_space<vmem>>, %arg5: memref<1x1xf32, #tpu.memory_space<smem>>, %arg6: memref<1x8xf32, #tpu.memory_space<vmem>>) attributes {dimension_semantics = [#tpu.dimension_semantics<parallel>], iteration_bounds = array<i64: 1>, scalar_prefetch = 0 : i64, scratch_operands = 0 : i64, tpu.core_type = #tpu.core_type<tc>, window_params = [{transform_indices = @transform_0, window_bounds = array<i64: 8, 10>}, {pipeline_mode = #tpu.pipeline_mode<synchronous>, transform_indices = @transform_1, window_bounds = array<i64: 20, 10>}, {pipeline_mode = #tpu.pipeline_mode<synchronous>, transform_indices = @transform_2, window_bounds = array<i64: 20, 1>}, {pipeline_mode = #tpu.pipeline_mode<synchronous>, transform_indices = @transform_3, window_bounds = array<i64: 1, 20>}, {transform_indices = @transform_4, window_bounds = array<i64: 1, 1>}, {transform_indices = @transform_5, window_bounds = array<i64: 1, 8>}]} {
    %c0 = arith.constant 0 : index
    %c0_0 = arith.constant 0 : index
    %0 = vector.load %arg2[%c0, %c0_0] : memref<20x10xf32, #tpu.memory_space<vmem>>, vector<20x10xf32>
    %c0_1 = arith.constant 0 : index
    %c0_2 = arith.constant 0 : index
    %1 = vector.load %arg3[%c0_1, %c0_2] : memref<20x1xf32, #tpu.memory_space<vmem>>, vector<20x1xf32>
    %c0_3 = arith.constant 0 : index
    %c0_4 = arith.constant 0 : index
    %2 = vector.load %arg4[%c0_3, %c0_4] : memref<1x20xf32, #tpu.memory_space<vmem>>, vector<1x20xf32>
    %c0_5 = arith.constant 0 : index
    %c0_6 = arith.constant 0 : index
    %3 = memref.load %arg5[%c0_5, %c0_6] : memref<1x1xf32, #tpu.memory_space<smem>>
    %c0_7 = arith.constant 0 : index
    %c0_8 = arith.constant 0 : index
    %4 = vector.load %arg1[%c0_7, %c0_8] : memref<8x10xf32, #tpu.memory_space<vmem>>, vector<8x10xf32>
    %cst = arith.constant dense<0.000000e+00> : vector<20x8xf32>
    %5 = tpu.matmul %0, %4, %cst {dimension_numbers = #tpu.dot_dimension_numbers<[1], [1], [0], [0], [0, 0, 1, 0], [], []>} : vector<20x10xf32>, vector<8x10xf32>, vector<20x8xf32> -> vector<20x8xf32>
    %6 = vector.broadcast %1 : vector<20x1xf32> to vector<20x8xf32>
    %7 = arith.addf %5, %6 : vector<20x8xf32>
    %cst_9 = arith.constant 0.000000e+00 : f32
    %8 = vector.broadcast %cst_9 : f32 to vector<20x8xf32>
    %9 = arith.maximumf %7, %8 : vector<20x8xf32>
    %cst_10 = arith.constant dense<0.000000e+00> : vector<1x8xf32>
    %10 = tpu.matmul %2, %9, %cst_10 {dimension_numbers = #tpu.dot_dimension_numbers<[1], [0], [0], [1], [0, 0, 1, 1], [], []>} : vector<1x20xf32>, vector<20x8xf32>, vector<1x8xf32> -> vector<1x8xf32>
    %11 = vector.broadcast %3 : f32 to vector<1x8xf32>
    %12 = arith.addf %10, %11 : vector<1x8xf32>
    %c0_11 = arith.constant 0 : index
    %c0_12 = arith.constant 0 : index
    %13 = vector.load %arg6[%c0_11, %c0_12] : memref<1x8xf32, #tpu.memory_space<vmem>>, vector<1x8xf32>
    tpu.vector_store %arg6[%c0_11, %c0_12], %12 {strides = array<i32>} : memref<1x8xf32, #tpu.memory_space<vmem>>, vector<1x8xf32>,
    return
  }
  func.func @transform_0(%arg0: i32) -> (i32, i32) {
    %c0_i32 = arith.constant 0 : i32
    %c0_i32_0 = arith.constant 0 : i32
    return %arg0, %c0_i32 : i32, i32
  }
  func.func @transform_1(%arg0: i32) -> (i32, i32) {
    %c0_i32 = arith.constant 0 : i32
    %c0_i32_0 = arith.constant 0 : i32
    %c0_i32_1 = arith.constant 0 : i32
    return %c0_i32, %c0_i32_0 : i32, i32
  }
  func.func @transform_2(%arg0: i32) -> (i32, i32) {
    %c0_i32 = arith.constant 0 : i32
    %c0_i32_0 = arith.constant 0 : i32
    %c0_i32_1 = arith.constant 0 : i32
    return %c0_i32, %c0_i32_0 : i32, i32
  }
  func.func @transform_3(%arg0: i32) -> (i32, i32) {
    %c0_i32 = arith.constant 0 : i32
    %c0_i32_0 = arith.constant 0 : i32
    %c0_i32_1 = arith.constant 0 : i32
    return %c0_i32, %c0_i32_0 : i32, i32
  }
  func.func @transform_4(%arg0: i32) -> (i32, i32) {
    %c0_i32 = arith.constant 0 : i32
    %c0_i32_0 = arith.constant 0 : i32
    %c0_i32_1 = arith.constant 0 : i32
    return %c0_i32, %c0_i32_0 : i32, i32
  }
  func.func @transform_5(%arg0: i32) -> (i32, i32) {
    %c0_i32 = arith.constant 0 : i32
    %c0_i32_0 = arith.constant 0 : i32
    return %c0_i32, %arg0 : i32, i32
  }
}

</mosaic_0001>

<llo_original>
// kernel: tpu_custom_call.1
$region0: #{tpu_custom_call.1}
  #allocation0 [shape = 'u32[]', space=smem, size = 0x4, offset = 0x4, fixed_abs, tag = 'smem constant byte address 0x4 - core index']
  #allocation1 [shape = 'u32[144,128]{1,0:T(1,128)}', space=vmem, size = 0x12000, scoped, tag = 'internal scratch']
  #allocation2 [shape = 'f32[1,1]{1,0:T(1,128)S(6)}', space=smem, size = 0x200, scoped, tag = 'scoped memory for tpu_custom_call.1']
  %s0 = inlined_call_operand.vmem [shape: f32[8,10], index: 0, kind: input, shape index: {}]
  %s1 = inlined_call_operand.vmem [shape: f32[20,10], index: 1, kind: input, shape index: {}]
  %s2 = inlined_call_operand.vmem [shape: f32[20,1], index: 2, kind: input, shape index: {}]
  %s3 = inlined_call_operand.vmem [shape: f32[1,20], index: 3, kind: input, shape index: {}]
  %s4 = inlined_call_operand.<no memory space> [shape: f32[1,1], index: 4, kind: input, shape index: {}]
  %s5 = inlined_call_operand.hbm [shape: f32[1,8], index: 5, kind: output, shape index: {}]
  %s6 = sld [smem:[#allocation0]]
  $region30: #{tpu_custom_call.1} parent=0
    _
  %s8 = ssub.s32 1, %s6
  %s9 = scalar_select 0, %s8, %s6
  %10 = sst [smem:[#allocation2]] %s4
  $region1: #{tpu_custom_call.1} parent=0
    #allocation3 [shape = 'u8[512]{0}', space=vmem, size = 0x400, scoped, tag = 'output window, operand 0, single buffered']
    #allocation4 [shape = 's32[1]{0}', space=sflag, size = 0x4, scoped, tag = 'scoped memory for tpu_custom_call.1']
    %11 = vsyncpa [#allocation4], 0
    // Predicated region
    $region2: #{tpu_custom_call.1} parent=1 // pred_check
      _
    $region3: #{tpu_custom_call.1} parent=1 // pred_check_branch
      %13 = sbr.rel (0) target = $region5
    $region4: #{tpu_custom_call.1} parent=1 // pred_region
      _
    $region5: #{tpu_custom_call.1} parent=1 // pred_fallthru
      _
    // Predicated region
    $region6: #{tpu_custom_call.1} parent=1 // pred_check
      _
    $region7: #{tpu_custom_call.1} parent=1 // pred_check_branch
      %15 = sbr.rel (0) target = $region9
    $region8: #{tpu_custom_call.1} parent=1 // pred_region
      _
    $region9: #{tpu_custom_call.1} parent=1 // pred_fallthru
      _
    // Predicated region
    $region10: #{tpu_custom_call.1} parent=1 // pred_check
      _
    $region11: #{tpu_custom_call.1} parent=1 // pred_check_branch
      %17 = sbr.rel (0) target = $region13
    $region12: #{tpu_custom_call.1} parent=1 // pred_region
      _
    $region13: #{tpu_custom_call.1} parent=1 // pred_fallthru
      _
    // Predicated region
    $region14: #{tpu_custom_call.1} parent=1 // pred_check
      _
    $region15: #{tpu_custom_call.1} parent=1 // pred_check_branch
      %19 = sbr.rel (0) target = $region17
    $region16: #{tpu_custom_call.1} parent=1 // pred_region
      _
    $region17: #{tpu_custom_call.1} parent=1 // pred_fallthru
      _
    // Predicated region
    $region18: #{tpu_custom_call.1} parent=1 // pred_check
      _
    $region19: #{tpu_custom_call.1} parent=1 // pred_check_branch
      %21 = sbr.rel (0) target = $region21
    $region20: #{tpu_custom_call.1} parent=1 // pred_region
      _
    $region21: #{tpu_custom_call.1} parent=1 // pred_fallthru
      _
    %v22 = vld [vmem:[%s1] sm:$0xff]
    %v23 = vld [vmem:[%s1 + $0x8] sm:$0xff]
    %v24 = vld [vmem:[%s1 + $0x10] sm:$0xf]
    %v25 = vld [vmem:[%s2] sm:$0xff]
    %v26 = vld [vmem:[%s2 + $0x8] sm:$0xff]
    %v27 = vld [vmem:[%s2 + $0x10] sm:$0xf]
    %v28 = vld [vmem:[%s3] sm:$0x1]
    %s29 = sld [smem:[#allocation2]]
    %v30 = vld [vmem:[%s0] sm:$0xff]
    %32 = vset.pattern.permute.xlu0 0
    %33 = vperm.xlu0 %32, %v25
    %v34 = vpop.permute.xlu0 %33
    %37 = vset.pattern.permute.xlu0 0
    %38 = vperm.xlu0 %37, %v26
    %v39 = vpop.permute.xlu0 %38
    %42 = vset.pattern.permute.xlu0 0
    %43 = vperm.xlu0 %42, %v27
    %v44 = vpop.permute.xlu0 %43
    %vm46 = vcmask 80896
    %v48 = vsel %vm46, %v22, 0
    %v51 = vsel %vm46, %v23, 0
    %v54 = vsel %vm46, %v24, 0
    %v57 = vsel %vm46, %v30, 0
    %59 = vmatprep.subr.mxu0 0.0
    %60 = vmatpush1.xpose.msra.mxu0 %v57
    %61 = vmatprep.subr.mxu0 0.0
    %62 = vmatpush1.xpose.msra.mxu0 0.0
    %63 = vmatprep.subr.mxu0 0.0
    %64 = vmatpush1.xpose.msra.mxu0 0.0
    %65 = vmatprep.subr.mxu0 0.0
    %66 = vmatpush1.xpose.msra.mxu0 0.0
    %67 = vmatprep.subr.mxu0 0.0
    %68 = vmatpush1.xpose.msra.mxu0 0.0
    %69 = vmatprep.subr.mxu0 0.0
    %70 = vmatpush1.xpose.msra.mxu0 0.0
    %71 = vmatprep.subr.mxu0 0.0
    %72 = vmatpush1.xpose.msra.mxu0 0.0
    %73 = vmatprep.subr.mxu0 0.0
    %74 = vmatpush1.xpose.msra.mxu0 0.0
    %75 = vmatprep.subr.mxu0 0.0
    %76 = vmatpush1.xpose.msra.mxu0 0.0
    %77 = vmatprep.subr.mxu0 0.0
    %78 = vmatpush1.xpose.msra.mxu0 0.0
    %79 = vmatprep.subr.mxu0 0.0
    %80 = vmatpush1.xpose.msra.mxu0 0.0
    %81 = vmatprep.subr.mxu0 0.0
    %82 = vmatpush1.xpose.msra.mxu0 0.0
    %83 = vmatprep.subr.mxu0 0.0
    %84 = vmatpush1.xpose.msra.mxu0 0.0
    %85 = vmatprep.subr.mxu0 0.0
    %86 = vmatpush1.xpose.msra.mxu0 0.0
    %87 = vmatprep.subr.mxu0 0.0
    %88 = vmatpush1.xpose.msra.mxu0 0.0
    %89 = vmatprep.subr.mxu0 0.0
    %90 = vmatpush1.xpose.msra.mxu0 0.0
    %91 = vmatprep.subr.mxu0 0.0
    %92 = vmatpush1.xpose.msra.mxu0 0.0
    %93 = vmatprep.subr.mxu0 0.0
    %94 = vmatpush1.xpose.msra.mxu0 0.0
    %95 = vmatprep.subr.mxu0 0.0
    %96 = vmatpush1.xpose.msra.mxu0 0.0
    %97 = vmatprep.subr.mxu0 0.0
    %98 = vmatpush1.xpose.msra.mxu0 0.0
    %99 = vmatprep.subr.mxu0 0.0
    %100 = vmatpush1.xpose.msra.mxu0 0.0
    %101 = vmatprep.subr.mxu0 0.0
    %102 = vmatpush1.xpose.msra.mxu0 0.0
    %103 = vmatprep.subr.mxu0 0.0
    %104 = vmatpush1.xpose.msra.mxu0 0.0
    %105 = vmatprep.subr.mxu0 0.0
    %106 = vmatpush1.xpose.msra.mxu0 0.0
    %107 = vmatprep.subr.mxu0 0.0
    %108 = vmatpush1.xpose.msra.mxu0 0.0
    %109 = vmatprep.subr.mxu0 0.0
    %110 = vmatpush1.xpose.msra.mxu0 0.0
    %111 = vmatprep.subr.mxu0 0.0
    %112 = vmatpush1.xpose.msra.mxu0 0.0
    %113 = vmatprep.subr.mxu0 0.0
    %114 = vmatpush1.xpose.msra.mxu0 0.0
    %115 = vmatprep.subr.mxu0 0.0
    %116 = vmatpush1.xpose.msra.mxu0 0.0
    %117 = vmatprep.subr.mxu0 0.0
    %118 = vmatpush1.xpose.msra.mxu0 0.0
    %119 = vmatprep.subr.mxu0 0.0
    %120 = vmatpush1.xpose.msra.mxu0 0.0
    %121 = vmatprep.subr.mxu0 0.0
    %122 = vmatpush1.xpose.msra.mxu0 0.0
    %123 = vmatprep.mubr.f32.mxu0 0.0
    %124 = vmatmul.mubr.f32.gmra.mrb[0].mxu0 %v48
    %v125 = vpop.f32.mrb[0].mxu0
    %v126 = vadd.f32 %v34, %v125
    %v127 = vpop.f32.mrb[0].mxu0
    %128 = vmatprep.mubr.f32.mxu0 0.0
    %129 = vmatmul.mubr.f32.gmra.mrb[0].mxu0 %v51
    %v130 = vpop.f32.mrb[0].mxu0
    %v131 = vadd.f32 %v39, %v130
    %v132 = vpop.f32.mrb[0].mxu0
    %133 = vmatprep.mubr.f32.mxu0 0.0
    %134 = vmatmul.mubr.f32.gmra.mrb[0].mxu0 %v54
    %v135 = vpop.f32.mrb[0].mxu0
    %v136 = vadd.f32 %v44, %v135
    %v137 = vpop.f32.mrb[0].mxu0
    %138 = vdwg.mxu0
    %v139 = vmax.f32 %v126, 0.0
    %v140 = vmax.f32 %v131, 0.0
    %v141 = vmax.f32 %v136, 0.0
    %v142 = vstv %s29
    %vm143 = vcmask 162816
    %v145 = vsel %vm143, %v28, 0
    %vm147 = vcmask 1043456
    %v149 = vsel %vm147, %v141, 0
    %151 = vmatprep.subr.mxu0 0.0
    %152 = vmatpush1.msra.mxu0 %v139
    %153 = vmatprep.subr.mxu0 0.0
    %154 = vmatpush1.msra.mxu0 %v140
    %155 = vmatprep.subr.mxu0 0.0
    %156 = vmatpush1.msra.mxu0 %v149
    %157 = vmatprep.subr.mxu0 0.0
    %158 = vmatpush1.msra.mxu0 0.0
    %159 = vmatprep.subr.mxu0 0.0
    %160 = vmatpush1.msra.mxu0 0.0
    %161 = vmatprep.subr.mxu0 0.0
    %162 = vmatpush1.msra.mxu0 0.0
    %163 = vmatprep.subr.mxu0 0.0
    %164 = vmatpush1.msra.mxu0 0.0
    %165 = vmatprep.subr.mxu0 0.0
    %166 = vmatpush1.msra.mxu0 0.0
    %167 = vmatprep.subr.mxu0 0.0
    %168 = vmatpush1.msra.mxu0 0.0
    %169 = vmatprep.subr.mxu0 0.0
    %170 = vmatpush1.msra.mxu0 0.0
    %171 = vmatprep.subr.mxu0 0.0
    %172 = vmatpush1.msra.mxu0 0.0
    %173 = vmatprep.subr.mxu0 0.0
    %174 = vmatpush1.msra.mxu0 0.0
    %175 = vmatprep.subr.mxu0 0.0
    %176 = vmatpush1.msra.mxu0 0.0
    %177 = vmatprep.subr.mxu0 0.0
    %178 = vmatpush1.msra.mxu0 0.0
    %179 = vmatprep.subr.mxu0 0.0
    %180 = vmatpush1.msra.mxu0 0.0
    %181 = vmatprep.subr.mxu0 0.0
    %182 = vmatpush1.msra.mxu0 0.0
    %183 = vmatprep.subr.mxu0 0.0
    %184 = vmatpush1.msra.mxu0 0.0
    %185 = vmatprep.subr.mxu0 0.0
    %186 = vmatpush1.msra.mxu0 0.0
    %187 = vmatprep.subr.mxu0 0.0
    %188 = vmatpush1.msra.mxu0 0.0
    %189 = vmatprep.subr.mxu0 0.0
    %190 = vmatpush1.msra.mxu0 0.0
    %191 = vmatprep.subr.mxu0 0.0
    %192 = vmatpush1.msra.mxu0 0.0
    %193 = vmatprep.subr.mxu0 0.0
    %194 = vmatpush1.msra.mxu0 0.0
    %195 = vmatprep.subr.mxu0 0.0
    %196 = vmatpush1.msra.mxu0 0.0
    %197 = vmatprep.subr.mxu0 0.0
    %198 = vmatpush1.msra.mxu0 0.0
    %199 = vmatprep.subr.mxu0 0.0
    %200 = vmatpush1.msra.mxu0 0.0
    %201 = vmatprep.subr.mxu0 0.0
    %202 = vmatpush1.msra.mxu0 0.0
    %203 = vmatprep.subr.mxu0 0.0
    %204 = vmatpush1.msra.mxu0 0.0
    %205 = vmatprep.subr.mxu0 0.0
    %206 = vmatpush1.msra.mxu0 0.0
    %207 = vmatprep.subr.mxu0 0.0
    %208 = vmatpush1.msra.mxu0 0.0
    %209 = vmatprep.subr.mxu0 0.0
    %210 = vmatpush1.msra.mxu0 0.0
    %211 = vmatprep.subr.mxu0 0.0
    %212 = vmatpush1.msra.mxu0 0.0
    %213 = vmatprep.subr.mxu0 0.0
    %214 = vmatpush1.msra.mxu0 0.0
    %215 = vmatprep.mubr.f32.mxu0 0.0
    %216 = vmatmul.mubr.f32.gmra.mrb[0].mxu0 %v145
    %v217 = vpop.f32.mrb[0].mxu0
    %v218 = vadd.f32 %v142, %v217
    %v219 = vpop.f32.mrb[0].mxu0
    %220 = vdwg.mxu0
    %vm221 = vcmask 57344
    %222 = vst.msk [vmem:[#allocation3] sm:$0x1] %vm221, %v218
    // Predicated region
    $region22: #{tpu_custom_call.1} parent=1 // pred_check
      _
    $region23: #{tpu_custom_call.1} parent=1 // pred_check_branch
      %224 = sbr.rel (0) target = $region25
    $region24: #{tpu_custom_call.1} parent=1 // pred_region
      %s226 = ssub.s32 16, 16
      %227 = vsyncadd [#allocation4], %s226
      %s229 = sshll.u32 [#allocation3], 4
      %s230 = int_to_ptr.vmem [resolvable:$true] %s229
      %232 = dma.vmem_to_hbm [thread:$0]  %s230, 16, %s5, [#allocation4]
    $region25: #{tpu_custom_call.1} parent=1 // pred_fallthru
      _
    // Predicated region
    $region26: #{tpu_custom_call.1} parent=1 // pred_check
      _
    $region27: #{tpu_custom_call.1} parent=1 // pred_check_branch
      %234 = sbr.rel (0) target = $region29
    $region28: #{tpu_custom_call.1} parent=1 // pred_region
      %235 = dma.done [#allocation4], 16
    $region29: #{tpu_custom_call.1} parent=1 // pred_fallthru
      _
    %236 = vsyncpa [#allocation4], 1

</llo_original>
